<compile_context>
chip_gen: v5e
topology: v5e:2x2
jax: 0.10.0
libtpu: 0.0.40
codegen_flags: <defaults>
</compile_context>

<pallas_src>
import jax
import jax.numpy as jnp
from jax.experimental import pallas as pl
from jax.experimental.pallas import tpu as pltpu

LANE = 128


def _head_kernel(x_ref,
                 w1_ref, b1_ref,
                 w2_ref, b2_ref,
                 w3_ref, b3_ref,
                 o_ref):
    """Fused DenseBlock x3 head: (fold(BN)+Linear -> ReLU) x2 -> fold(BN)+Linear."""
    # DenseBlock 1: BN folded into W/bias; dropout = identity (eval); ReLU.
    # x arrives already in bf16; MXU accumulates in f32.
    h = jnp.dot(x_ref[...], w1_ref[...], preferred_element_type=jnp.float32)
    h = jnp.maximum(h + b1_ref[...], 0.0)

    # DenseBlock 2
    h = jnp.dot(h.astype(jnp.bfloat16), w2_ref[...],
                preferred_element_type=jnp.float32)
    h = jnp.maximum(h + b2_ref[...], 0.0)

    # DenseBlock 3 (classifier): Identity activation. Output columns are
    # zero-padded to 128 so the store is a lane-dense, unmasked vst.
    h = jnp.dot(h.astype(jnp.bfloat16), w3_ref[...],
                preferred_element_type=jnp.float32)
    o_ref[...] = (h + b3_ref[...]).astype(o_ref.dtype)


def _pick_tile_b(B, max_tile_rows=2048):
    """Largest multiple-of-8 divisor of B (capped), preferring >=2 grid steps."""
    if B % 8 != 0:
        return B  # whole-batch tile: block dim == full array dim is always legal
    cap = min(B, max_tile_rows)
    tile = 8
    for cand in range(8, cap + 1, 8):
        if B % cand == 0:
            tile = cand
    # If the whole batch fit in one tile, split in two so both v7x TensorCores
    # get a grid step (dimension_semantics=("parallel",)).
    if tile == B and B >= 16 and (B // 2) % 8 == 0:
        tile = B // 2
    return tile


def giz_head_forward(x, params, n_classes, *, tile_b=None,
                     out_dtype=jnp.bfloat16, return_padded=False):
    """x: [B, fc_size] backbone features. params: folded/padded blocks.

    Returns logits [B, n_classes] (out_dtype), or the padded [B, 128] slab if
    return_padded=True (avoids the extra HBM pass of the wrapper slice)."""
    B, F = x.shape
    (w1, b1), (w2, b2), (w3, b3) = params
    n_pad = w3.shape[1]

    # Feed the kernel bf16 features: halves the dominant HBM traffic term and
    # is bit-identical to loading f32 and rounding before the first dot.
    # (Best case: the backbone already emits bf16 and this is a no-op.)
    if x.dtype != jnp.bfloat16:
        x = x.astype(jnp.bfloat16)

    if tile_b is None:
        tile_b = _pick_tile_b(B)
    assert tile_b == B or (tile_b % 8 == 0 and B % tile_b == 0), (
        "tile_b must equal B or be a multiple of 8 that divides B")

    def const_spec(arr):
        # Constant index map -> the block is never re-fetched; single-buffer it
        # to save VMEM (frees headroom for bigger batch tiles, esp. on v7x).
        assert arr.ndim == 2
        try:
            return pl.BlockSpec(arr.shape, lambda i: (0, 0),
                                pipeline_mode=pl.Buffered(1))
        except TypeError:  # older jax without pipeline_mode on BlockSpec
            return pl.BlockSpec(arr.shape, lambda i: (0, 0))

    out_itemsize = jnp.dtype(out_dtype).itemsize
    weight_bytes = sum(int(a.size) * a.dtype.itemsize
                       for a in (w1, b1, w2, b2, w3, b3))
    flops = 2 * B * (w1.shape[0] * w1.shape[1]
                     + w2.shape[0] * w2.shape[1]
                     + w3.shape[0] * n_classes)
    bytes_accessed = (weight_bytes
                      + int(x.size) * x.dtype.itemsize
                      + B * n_pad * out_itemsize)

    # Scoped-VMEM sizing (matters on v5e whose default limit is 16 MiB):
    # double-buffered x/out tiles + params + f32 intermediate activations.
    act_bytes = tile_b * (w1.shape[1] + w2.shape[1] + n_pad) * 4
    vmem_need = (2 * tile_b * F * 2
                 + 2 * tile_b * n_pad * out_itemsize
                 + 2 * weight_bytes
                 + act_bytes)
    vmem_limit = int(min(max(int(vmem_need * 1.5) + (8 << 20), 32 << 20),
                         48 << 20))

    out = pl.pallas_call(
        _head_kernel,
        out_shape=jax.ShapeDtypeStruct((B, n_pad), out_dtype),
        grid_spec=pltpu.PrefetchScalarGridSpec(
            num_scalar_prefetch=0,
            grid=(B // tile_b,),
            in_specs=[
                pl.BlockSpec((tile_b, F), lambda i: (i, 0)),
                const_spec(w1), const_spec(b1),
                const_spec(w2), const_spec(b2),
                const_spec(w3), const_spec(b3),
            ],
            out_specs=pl.BlockSpec((tile_b, n_pad), lambda i: (i, 0)),
        ),
        compiler_params=pltpu.CompilerParams(
            dimension_semantics=("parallel",),
            vmem_limit_bytes=vmem_limit),
        cost_estimate=pl.CostEstimate(
            flops=flops, transcendentals=0, bytes_accessed=bytes_accessed),
    )(x, w1, b1, w2, b2, w3, b3)

    if return_padded:
        return out  # [B, 128] slab; consumer indexes columns < n_classes
    return out[:, :n_classes]


def make_dense_block_raw(key, fc_size, out_size, eps=1e-5):
    """Deterministic eval-mode params for one DenseBlock (unfolded, f32)."""
    k_g, k_b, k_m, k_v, k_w = jax.random.split(key, 5)
    gamma = 1.0 + 0.1 * jax.random.normal(k_g, (fc_size,), jnp.float32)
    beta = 0.1 * jax.random.normal(k_b, (fc_size,), jnp.float32)
    running_mean = 0.1 * jax.random.normal(k_m, (fc_size,), jnp.float32)
    running_var = 1.0 + 0.1 * jax.random.uniform(k_v, (fc_size,), jnp.float32)

    scale = gamma / jnp.sqrt(running_var + eps)            # [F]
    shift = beta - running_mean * scale                    # [F]

    # nn.Linear weight is (out, in); Xavier-normal then transpose to (in, out).
    std = jnp.sqrt(2.0 / (fc_size + out_size))
    w_torch = std * jax.random.normal(k_w, (out_size, fc_size), jnp.float32)
    w = w_torch.T                                          # [F_in, F_out]
    return scale, shift, w


def fold_block(scale, shift, w, pad_to=None):
    """Fold BN into the Linear; weight -> bf16, bias stays f32; optional lane pad."""
    w_folded = scale[:, None] * w                          # [F_in, F_out] f32
    bias = (shift @ w).reshape(1, -1)                      # [1,  F_out]   f32
    out_size = w.shape[1]
    if pad_to is not None and pad_to > out_size:
        w_folded = jnp.pad(w_folded, ((0, 0), (0, pad_to - out_size)))
        bias = jnp.pad(bias, ((0, 0), (0, pad_to - out_size)))
    return w_folded.astype(jnp.bfloat16), bias.astype(jnp.float32)


def reference_forward_f32(x, raw_params):
    """Original module semantics (eval mode), full f32: BN -> Linear -> act."""
    h = x.astype(jnp.float32)
    n = len(raw_params)
    for idx, (scale, shift, w) in enumerate(raw_params):
        h = (h * scale + shift) @ w
        if idx < n - 1:
            h = jnp.maximum(h, 0.0)
    return h


def reference_forward_kernel_math(x, params, n_classes, out_dtype=jnp.bfloat16):
    """Pure-JAX replica of the exact kernel arithmetic (bf16 in, f32 acc, bf16 out)."""
    (w1, b1), (w2, b2), (w3, b3) = params
    h = x.astype(jnp.bfloat16)
    h = jnp.maximum(jnp.dot(h, w1, preferred_element_type=jnp.float32) + b1, 0.0)
    h = jnp.maximum(jnp.dot(h.astype(jnp.bfloat16), w2,
                            preferred_element_type=jnp.float32) + b2, 0.0)
    h = jnp.dot(h.astype(jnp.bfloat16), w3,
                preferred_element_type=jnp.float32) + b3
    return h.astype(out_dtype)[:, :n_classes]


if __name__ == "__main__":
    # args: base_name='resnet', model_name='resnet18' -> fc_size=512,
    #       nb_layer=2, n_classes=10; drop_rate irrelevant in eval mode.
    fc_size = 512
    nb_layer = 2
    n_classes = 10
    batch = 16          # small demo batch; _pick_tile_b gives two grid steps

    key = jax.random.PRNGKey(0)
    k_x, k_p = jax.random.split(key)

    # Backbone features (stand-in for resnet18 global-avg-pooled output).
    x = jax.random.normal(k_x, (batch, fc_size), jnp.float32)

    # Build DenseBlock chain: 512 -> 256 -> 128 -> n_classes.
    raw_params = []
    f = fc_size
    p_keys = jax.random.split(k_p, nb_layer + 1)
    for i in range(nb_layer):
        raw_params.append(make_dense_block_raw(p_keys[i], f, f // 2))
        f = f // 2
    raw_params.append(make_dense_block_raw(p_keys[nb_layer], f, n_classes))

    # Fold BN into W/bias, bf16 weights, pad final block to a lane-dense 128.
    n_pad = ((n_classes + LANE - 1) // LANE) * LANE
    params = tuple(
        fold_block(s, b, w, pad_to=(n_pad if i == nb_layer else None))
        for i, (s, b, w) in enumerate(raw_params))

    out = giz_head_forward(x, params, n_classes)
    out = jax.block_until_ready(out)
    assert out.shape == (batch, n_classes)
    assert out.dtype == jnp.bfloat16

    # Tight check: kernel vs identical bf16-in / f32-acc / bf16-out arithmetic
    # done in plain JAX (only MXU-vs-XLA accumulation order can differ).
    ref_km = reference_forward_kernel_math(x, params, n_classes)
    assert jnp.allclose(out.astype(jnp.float32), ref_km.astype(jnp.float32),
                        atol=0.03, rtol=0.03), "mismatch vs kernel-math reference"

    # Loose check: kernel vs original f32 module semantics (bf16 quantization
    # of weights/activations is the only source of difference).
    ref_f32 = reference_forward_f32(x, raw_params)
    assert jnp.allclose(out.astype(jnp.float32), ref_f32,
                        atol=0.12, rtol=0.12), "mismatch vs f32 module reference"

    print("KERNEL_OK")
</pallas_src>

<mosaic_0001>
module attributes {stable_mosaic.version = 11 : i64} {
  func.func @_head_kernel(%arg0: i32, %arg1: memref<8x512xbf16, #tpu.memory_space<vmem>>, %arg2: memref<512x256xbf16, #tpu.memory_space<vmem>>, %arg3: memref<1x256xf32, #tpu.memory_space<vmem>>, %arg4: memref<256x128xbf16, #tpu.memory_space<vmem>>, %arg5: memref<1x128xf32, #tpu.memory_space<vmem>>, %arg6: memref<128x128xbf16, #tpu.memory_space<vmem>>, %arg7: memref<1x128xf32, #tpu.memory_space<vmem>>, %arg8: memref<8x128xbf16, #tpu.memory_space<vmem>>) attributes {dimension_semantics = [#tpu.dimension_semantics<parallel>], iteration_bounds = array<i64: 2>, scalar_prefetch = 0 : i64, scratch_operands = 0 : i64, tpu.core_type = #tpu.core_type<tc>, window_params = [{transform_indices = @transform_0, window_bounds = array<i64: 8, 512>}, {pipeline_mode = #tpu.pipeline_mode<synchronous>, transform_indices = @transform_1, window_bounds = array<i64: 512, 256>}, {pipeline_mode = #tpu.pipeline_mode<synchronous>, transform_indices = @transform_2, window_bounds = array<i64: 1, 256>}, {pipeline_mode = #tpu.pipeline_mode<synchronous>, transform_indices = @transform_3, window_bounds = array<i64: 256, 128>}, {pipeline_mode = #tpu.pipeline_mode<synchronous>, transform_indices = @transform_4, window_bounds = array<i64: 1, 128>}, {pipeline_mode = #tpu.pipeline_mode<synchronous>, transform_indices = @transform_5, window_bounds = array<i64: 128, 128>}, {pipeline_mode = #tpu.pipeline_mode<synchronous>, transform_indices = @transform_6, window_bounds = array<i64: 1, 128>}, {transform_indices = @transform_7, window_bounds = array<i64: 8, 128>}]} {
    %c0 = arith.constant 0 : index
    %c0_0 = arith.constant 0 : index
    %0 = vector.load %arg1[%c0, %c0_0] : memref<8x512xbf16, #tpu.memory_space<vmem>>, vector<8x512xbf16>
    %c0_1 = arith.constant 0 : index
    %c0_2 = arith.constant 0 : index
    %1 = vector.load %arg2[%c0_1, %c0_2] : memref<512x256xbf16, #tpu.memory_space<vmem>>, vector<512x256xbf16>
    %cst = arith.constant dense<0.000000e+00> : vector<8x256xf32>
    %2 = tpu.matmul %0, %1, %cst {dimension_numbers = #tpu.dot_dimension_numbers<[1], [0], [0], [1], [0, 0, 1, 1], [], []>} : vector<8x512xbf16>, vector<512x256xbf16>, vector<8x256xf32> -> vector<8x256xf32>
    %c0_3 = arith.constant 0 : index
    %c0_4 = arith.constant 0 : index
    %3 = vector.load %arg3[%c0_3, %c0_4] : memref<1x256xf32, #tpu.memory_space<vmem>>, vector<1x256xf32>
    %4 = vector.broadcast %3 : vector<1x256xf32> to vector<8x256xf32>
    %5 = arith.addf %2, %4 : vector<8x256xf32>
    %cst_5 = arith.constant 0.000000e+00 : f32
    %6 = vector.broadcast %cst_5 : f32 to vector<8x256xf32>
    %7 = arith.maximumf %5, %6 : vector<8x256xf32>
    %8 = arith.truncf %7 : vector<8x256xf32> to vector<8x256xbf16>
    %c0_6 = arith.constant 0 : index
    %c0_7 = arith.constant 0 : index
    %9 = vector.load %arg4[%c0_6, %c0_7] : memref<256x128xbf16, #tpu.memory_space<vmem>>, vector<256x128xbf16>
    %cst_8 = arith.constant dense<0.000000e+00> : vector<8x128xf32>
    %10 = tpu.matmul %8, %9, %cst_8 {dimension_numbers = #tpu.dot_dimension_numbers<[1], [0], [0], [1], [0, 0, 1, 1], [], []>} : vector<8x256xbf16>, vector<256x128xbf16>, vector<8x128xf32> -> vector<8x128xf32>
    %c0_9 = arith.constant 0 : index
    %c0_10 = arith.constant 0 : index
    %11 = vector.load %arg5[%c0_9, %c0_10] : memref<1x128xf32, #tpu.memory_space<vmem>>, vector<1x128xf32>
    %12 = vector.broadcast %11 : vector<1x128xf32> to vector<8x128xf32>
    %13 = arith.addf %10, %12 : vector<8x128xf32>
    %cst_11 = arith.constant 0.000000e+00 : f32
    %14 = vector.broadcast %cst_11 : f32 to vector<8x128xf32>
    %15 = arith.maximumf %13, %14 : vector<8x128xf32>
    %16 = arith.truncf %15 : vector<8x128xf32> to vector<8x128xbf16>
    %c0_12 = arith.constant 0 : index
    %c0_13 = arith.constant 0 : index
    %17 = vector.load %arg6[%c0_12, %c0_13] : memref<128x128xbf16, #tpu.memory_space<vmem>>, vector<128x128xbf16>
    %cst_14 = arith.constant dense<0.000000e+00> : vector<8x128xf32>
    %18 = tpu.matmul %16, %17, %cst_14 {dimension_numbers = #tpu.dot_dimension_numbers<[1], [0], [0], [1], [0, 0, 1, 1], [], []>} : vector<8x128xbf16>, vector<128x128xbf16>, vector<8x128xf32> -> vector<8x128xf32>
    %c0_15 = arith.constant 0 : index
    %c0_16 = arith.constant 0 : index
    %19 = vector.load %arg7[%c0_15, %c0_16] : memref<1x128xf32, #tpu.memory_space<vmem>>, vector<1x128xf32>
    %20 = vector.broadcast %19 : vector<1x128xf32> to vector<8x128xf32>
    %21 = arith.addf %18, %20 : vector<8x128xf32>
    %22 = arith.truncf %21 : vector<8x128xf32> to vector<8x128xbf16>
    %c0_17 = arith.constant 0 : index
    %c0_18 = arith.constant 0 : index
    %23 = vector.load %arg8[%c0_17, %c0_18] : memref<8x128xbf16, #tpu.memory_space<vmem>>, vector<8x128xbf16>
    tpu.vector_store %arg8[%c0_17, %c0_18], %22 {strides = array<i32>} : memref<8x128xbf16, #tpu.memory_space<vmem>>, vector<8x128xbf16>,
    return
  }
  func.func @transform_0(%arg0: i32) -> (i32, i32) {
    %c0_i32 = arith.constant 0 : i32
    %c0_i32_0 = arith.constant 0 : i32
    return %arg0, %c0_i32 : i32, i32
  }
  func.func @transform_1(%arg0: i32) -> (i32, i32) {
    %c0_i32 = arith.constant 0 : i32
    %c0_i32_0 = arith.constant 0 : i32
    %c0_i32_1 = arith.constant 0 : i32
    return %c0_i32, %c0_i32_0 : i32, i32
  }
  func.func @transform_2(%arg0: i32) -> (i32, i32) {
    %c0_i32 = arith.constant 0 : i32
    %c0_i32_0 = arith.constant 0 : i32
    %c0_i32_1 = arith.constant 0 : i32
    return %c0_i32, %c0_i32_0 : i32, i32
  }
  func.func @transform_3(%arg0: i32) -> (i32, i32) {
    %c0_i32 = arith.constant 0 : i32
    %c0_i32_0 = arith.constant 0 : i32
    %c0_i32_1 = arith.constant 0 : i32
    return %c0_i32, %c0_i32_0 : i32, i32
  }
  func.func @transform_4(%arg0: i32) -> (i32, i32) {
    %c0_i32 = arith.constant 0 : i32
    %c0_i32_0 = arith.constant 0 : i32
    %c0_i32_1 = arith.constant 0 : i32
    return %c0_i32, %c0_i32_0 : i32, i32
  }
  func.func @transform_5(%arg0: i32) -> (i32, i32) {
    %c0_i32 = arith.constant 0 : i32
    %c0_i32_0 = arith.constant 0 : i32
    %c0_i32_1 = arith.constant 0 : i32
    return %c0_i32, %c0_i32_0 : i32, i32
  }
  func.func @transform_6(%arg0: i32) -> (i32, i32) {
    %c0_i32 = arith.constant 0 : i32
    %c0_i32_0 = arith.constant 0 : i32
    %c0_i32_1 = arith.constant 0 : i32
    return %c0_i32, %c0_i32_0 : i32, i32
  }
  func.func @transform_7(%arg0: i32) -> (i32, i32) {
    %c0_i32 = arith.constant 0 : i32
    %c0_i32_0 = arith.constant 0 : i32
    return %arg0, %c0_i32 : i32, i32
  }
}

</mosaic_0001>

<llo_original>
// kernel: tpu_custom_call.1
$region0: #{tpu_custom_call.1}
  #allocation0 [shape = 'u32[]', space=smem, size = 0x4, offset = 0x4, fixed_abs, tag = 'smem constant byte address 0x4 - core index']
  #allocation1 [shape = 'u32[72,128]{1,0:T(1,128)}', space=vmem, size = 0x9000, scoped, tag = 'internal scratch']
  %s0 = inlined_call_operand.hbm [shape: bf16[16,512], index: 0, kind: input, shape index: {}]
  %s1 = inlined_call_operand.hbm [shape: bf16[512,256], index: 1, kind: input, shape index: {}]
  %s2 = inlined_call_operand.hbm [shape: f32[1,256], index: 2, kind: input, shape index: {}]
  %s3 = inlined_call_operand.hbm [shape: bf16[256,128], index: 3, kind: input, shape index: {}]
  %s4 = inlined_call_operand.vmem [shape: f32[1,128], index: 4, kind: input, shape index: {}]
  %s5 = inlined_call_operand.hbm [shape: bf16[128,128], index: 5, kind: input, shape index: {}]
  %s6 = inlined_call_operand.vmem [shape: f32[1,128], index: 6, kind: input, shape index: {}]
  %s7 = inlined_call_operand.hbm [shape: bf16[16,128], index: 7, kind: output, shape index: {}]
  %s8 = sld [smem:[#allocation0]]
  $region81: #{tpu_custom_call.1} parent=0
    _
  %s10 = ssub.s32 1, %s8
  %s11 = scalar_select 0, %s10, %s8
  $region1: #{tpu_custom_call.1} parent=0
    #allocation2 [shape = 'u8[16384]{0}', space=vmem, size = 0x4000, scoped, tag = 'input window, operand 0']
    #allocation3 [shape = 's32[2]{0}', space=sflag, size = 0x8, scoped, tag = 'scoped memory for tpu_custom_call.1']
    #allocation4 [shape = 's32[2]{0}', space=sflag, size = 0x8, scoped, tag = 'scoped memory for tpu_custom_call.1']
    #allocation5 [shape = 'u8[262144]{0}', space=vmem, size = 0x40000, scoped, tag = 'input window, operand 1, single buffered']
    #allocation6 [shape = 's32[1]{0}', space=sflag, size = 0x4, scoped, tag = 'scoped memory for tpu_custom_call.1']
    #allocation7 [shape = 'u8[1024]{0}', space=vmem, size = 0x400, scoped, tag = 'input window, operand 2, single buffered']
    #allocation8 [shape = 'u8[65536]{0}', space=vmem, size = 0x10000, scoped, tag = 'input window, operand 3, single buffered']
    #allocation9 [shape = 's32[1]{0}', space=sflag, size = 0x4, scoped, tag = 'scoped memory for tpu_custom_call.1']
    #allocation10 [shape = 'u8[32768]{0}', space=vmem, size = 0x8000, scoped, tag = 'input window, operand 5, single buffered']
    #allocation11 [shape = 'u8[4096]{0}', space=vmem, size = 0x1000, scoped, tag = 'output window, operand 0']
    %12 = vsyncpa [#allocation3], 0
    %s13 = scalar_lea.sflag [#allocation3], 1
    %14 = vsyncpa %s13, 0
    %15 = vsyncpa [#allocation6], 0
    %16 = vsyncpa [#allocation9], 0
    %17 = vsyncpa [#allocation4], 0
    %s18 = scalar_lea.sflag [#allocation4], 1
    %19 = vsyncpa %s18, 0
    loop: start=0, step=1, limit=4
    $region2: #{tpu_custom_call.1} parent=1 // loop_pre_header
      _
    $region3: #{tpu_custom_call.1} parent=1 // loop_header
      %s21 = sphi 0, %s25
      %p22 = scmp.ge.s32.totalorder %s21, 4
      %s31 = sphi 0, %s33
      %s34 = sphi 0, %s31
      %s35 = sphi 0, %s34
      %s51 = sphi 0, %s35
      %s55 = sphi 0, %s55
      %s57 = sphi 0, %s55
      %s58 = sphi 0, %s57
      %s72 = sphi 0, %s58
      %s76 = sphi 0, %s76
      %s78 = sphi 0, %s76
      %s79 = sphi 0, %s78
      %s93 = sphi 0, %s79
      %s97 = sphi 0, %s97
      %s99 = sphi 0, %s97
      %s100 = sphi 0, %s99
      %s114 = sphi 0, %s100
      %s118 = sphi 0, %s118
      %s120 = sphi 0, %s118
      %s121 = sphi 0, %s120
      %s135 = sphi 0, %s121
      %s139 = sphi 0, %s139
      %s141 = sphi 0, %s139
      %s142 = sphi 0, %s141
      %s156 = sphi 0, %s142
      %s160 = sphi 0, %s160
      %s162 = sphi 0, %s160
      %s163 = sphi 0, %s162
      %s177 = sphi 0, %s163
      %s183 = sphi 0, %s185
      %s186 = sphi 0, %s183
      %s187 = sphi 0, %s186
      %s203 = sphi 0, %s187
    $region4: #{tpu_custom_call.1} parent=1 // loop_header_branch
      %24 = sbr.rel (%p22) target = $region8
    $region5: #{tpu_custom_call.1} parent=1 // loop_body
      %s26 = ssub.s32 %s21, 1
      %s27 = ssub.s32 %s21, 2
      %s28 = sadd.s32 %s21, 1
      %s29 = ssub.s32 %s21, %s28
      %p30 = scmp.eq.s32.totalorder %s29, 0
      %s32 = sadd.s32 %s31, 1
      %s33 = scalar_select %p30, %s31, %s32
      %p36 = pneg %p30
      %p37 = scmp.eq.s32.totalorder %s21, 1
      %p38 = por %p36, %p37
      %p39 = scmp.ne.s32.totalorder %s31, %s34
      %p40 = scmp.eq.s32.totalorder %s21, 0
      %p41 = por %p39, %p40
      %p42 = scmp.ne.s32.totalorder %s31, %s34
      %p43 = scmp.eq.s32.totalorder %s26, 1
      %p44 = por %p42, %p43
      %p45 = scmp.ne.s32.totalorder %s34, %s35
      %p46 = scmp.eq.s32.totalorder %s26, 0
      %p47 = por %p45, %p46
      %p48 = scmp.ne.s32.totalorder %s34, %s35
      %p49 = scmp.eq.s32.totalorder %s27, 1
      %p50 = por %p48, %p49
      %p52 = scmp.ne.s32.totalorder %s35, %s51
      %p53 = scmp.eq.s32.totalorder %s27, 0
      %p54 = por %p52, %p53
      %s56 = sadd.s32 %s55, 1
      %p59 = scmp.eq.s32.totalorder %s21, 1
      %p60 = scmp.ne.s32.totalorder %s55, %s57
      %p61 = scmp.eq.s32.totalorder %s21, 0
      %p62 = por %p60, %p61
      %p63 = scmp.ne.s32.totalorder %s55, %s57
      %p64 = scmp.eq.s32.totalorder %s26, 1
      %p65 = por %p63, %p64
      %p66 = scmp.ne.s32.totalorder %s57, %s58
      %p67 = scmp.eq.s32.totalorder %s26, 0
      %p68 = por %p66, %p67
      %p69 = scmp.ne.s32.totalorder %s57, %s58
      %p70 = scmp.eq.s32.totalorder %s27, 1
      %p71 = por %p69, %p70
      %p73 = scmp.ne.s32.totalorder %s58, %s72
      %p74 = scmp.eq.s32.totalorder %s27, 0
      %p75 = por %p73, %p74
      %s77 = sadd.s32 %s76, 1
      %p80 = scmp.eq.s32.totalorder %s21, 1
      %p81 = scmp.ne.s32.totalorder %s76, %s78
      %p82 = scmp.eq.s32.totalorder %s21, 0
      %p83 = por %p81, %p82
      %p84 = scmp.ne.s32.totalorder %s76, %s78
      %p85 = scmp.eq.s32.totalorder %s26, 1
      %p86 = por %p84, %p85
      %p87 = scmp.ne.s32.totalorder %s78, %s79
      %p88 = scmp.eq.s32.totalorder %s26, 0
      %p89 = por %p87, %p88
      %p90 = scmp.ne.s32.totalorder %s78, %s79
      %p91 = scmp.eq.s32.totalorder %s27, 1
      %p92 = por %p90, %p91
      %p94 = scmp.ne.s32.totalorder %s79, %s93
      %p95 = scmp.eq.s32.totalorder %s27, 0
      %p96 = por %p94, %p95
      %s98 = sadd.s32 %s97, 1
      %p101 = scmp.eq.s32.totalorder %s21, 1
      %p102 = scmp.ne.s32.totalorder %s97, %s99
      %p103 = scmp.eq.s32.totalorder %s21, 0
      %p104 = por %p102, %p103
      %p105 = scmp.ne.s32.totalorder %s97, %s99
      %p106 = scmp.eq.s32.totalorder %s26, 1
      %p107 = por %p105, %p106
      %p108 = scmp.ne.s32.totalorder %s99, %s100
      %p109 = scmp.eq.s32.totalorder %s26, 0
      %p110 = por %p108, %p109
      %p111 = scmp.ne.s32.totalorder %s99, %s100
      %p112 = scmp.eq.s32.totalorder %s27, 1
      %p113 = por %p111, %p112
      %p115 = scmp.ne.s32.totalorder %s100, %s114
      %p116 = scmp.eq.s32.totalorder %s27, 0
      %p117 = por %p115, %p116
      %s119 = sadd.s32 %s118, 1
      %p122 = scmp.eq.s32.totalorder %s21, 1
      %p123 = scmp.ne.s32.totalorder %s118, %s120
      %p124 = scmp.eq.s32.totalorder %s21, 0
      %p125 = por %p123, %p124
      %p126 = scmp.ne.s32.totalorder %s118, %s120
      %p127 = scmp.eq.s32.totalorder %s26, 1
      %p128 = por %p126, %p127
      %p129 = scmp.ne.s32.totalorder %s120, %s121
      %p130 = scmp.eq.s32.totalorder %s26, 0
      %p131 = por %p129, %p130
      %p132 = scmp.ne.s32.totalorder %s120, %s121
      %p133 = scmp.eq.s32.totalorder %s27, 1
      %p134 = por %p132, %p133
      %p136 = scmp.ne.s32.totalorder %s121, %s135
      %p137 = scmp.eq.s32.totalorder %s27, 0
      %p138 = por %p136, %p137
      %s140 = sadd.s32 %s139, 1
      %p143 = scmp.eq.s32.totalorder %s21, 1
      %p144 = scmp.ne.s32.totalorder %s139, %s141
      %p145 = scmp.eq.s32.totalorder %s21, 0
      %p146 = por %p144, %p145
      %p147 = scmp.ne.s32.totalorder %s139, %s141
      %p148 = scmp.eq.s32.totalorder %s26, 1
      %p149 = por %p147, %p148
      %p150 = scmp.ne.s32.totalorder %s141, %s142
      %p151 = scmp.eq.s32.totalorder %s26, 0
      %p152 = por %p150, %p151
      %p153 = scmp.ne.s32.totalorder %s141, %s142
      %p154 = scmp.eq.s32.totalorder %s27, 1
      %p155 = por %p153, %p154
      %p157 = scmp.ne.s32.totalorder %s142, %s156
      %p158 = scmp.eq.s32.totalorder %s27, 0
      %p159 = por %p157, %p158
      %s161 = sadd.s32 %s160, 1
      %p164 = scmp.eq.s32.totalorder %s21, 1
      %p165 = scmp.ne.s32.totalorder %s160, %s162
      %p166 = scmp.eq.s32.totalorder %s21, 0
      %p167 = por %p165, %p166
      %p168 = scmp.ne.s32.totalorder %s160, %s162
      %p169 = scmp.eq.s32.totalorder %s26, 1
      %p170 = por %p168, %p169
      %p171 = scmp.ne.s32.totalorder %s162, %s163
      %p172 = scmp.eq.s32.totalorder %s26, 0
      %p173 = por %p171, %p172
      %p174 = scmp.ne.s32.totalorder %s162, %s163
      %p175 = scmp.eq.s32.totalorder %s27, 1
      %p176 = por %p174, %p175
      %p178 = scmp.ne.s32.totalorder %s163, %s177
      %p179 = scmp.eq.s32.totalorder %s27, 0
      %p180 = por %p178, %p179
      %s181 = ssub.s32 %s21, %s28
      %p182 = scmp.eq.s32.totalorder %s181, 0
      %s184 = sadd.s32 %s183, 1
      %s185 = scalar_select %p182, %s183, %s184
      %p188 = pneg %p182
      %p189 = scmp.eq.s32.totalorder %s21, 1
      %p190 = por %p188, %p189
      %p191 = scmp.ne.s32.totalorder %s183, %s186
      %p192 = scmp.eq.s32.totalorder %s21, 0
      %p193 = por %p191, %p192
      %p194 = scmp.ne.s32.totalorder %s183, %s186
      %p195 = scmp.eq.s32.totalorder %s26, 1
      %p196 = por %p194, %p195
      %p197 = scmp.ne.s32.totalorder %s186, %s187
      %p198 = scmp.eq.s32.totalorder %s26, 0
      %p199 = por %p197, %p198
      %p200 = scmp.ne.s32.totalorder %s186, %s187
      %p201 = scmp.eq.s32.totalorder %s27, 1
      %p202 = por %p200, %p201
      %p204 = scmp.ne.s32.totalorder %s187, %s203
      %p205 = scmp.eq.s32.totalorder %s27, 0
      %p206 = por %p204, %p205
      %p207 = scmp.le.s32.totalorder 1, %s21
      %p208 = scmp.lt.s32.totalorder %s21, 3
      %p209 = pnand %p207, %p208
      %p210 = pneg %p209
      // Predicated region
      $region9: #{tpu_custom_call.1} parent=5 // pred_check
        _
      $region10: #{tpu_custom_call.1} parent=5 // pred_check_branch
        %212 = sbr.rel (%p209) target = $region12
      $region11: #{tpu_custom_call.1} parent=5 // pred_region
        %s213 = ssub.s32 %s21, 1
        // Predicated region
        $region13: #{tpu_custom_call.1} parent=11 // pred_check
          %p214 = pneg %p68
        $region14: #{tpu_custom_call.1} parent=11 // pred_check_branch
          %216 = sbr.rel (%p214) target = $region16
        $region15: #{tpu_custom_call.1} parent=11 // pred_region
          %218 = vsyncadd [#allocation6], 0
          %s219 = sshll.u32 %s1, 4
          %s220 = int_to_ptr.hbm [resolvable:$true] %s219
          %s221 = sshll.u32 [#allocation5], 4
          %s222 = int_to_ptr.vmem [resolvable:$true] %s221
          %227 = dma.hbm_to_vmem [thread:$0]  %s220, 8192, %s222, [#allocation6], 128, 128, 8
        $region16: #{tpu_custom_call.1} parent=11 // pred_fallthru
          _
        // Predicated region
        $region17: #{tpu_custom_call.1} parent=11 // pred_check
          %p228 = pneg %p89
        $region18: #{tpu_custom_call.1} parent=11 // pred_check_branch
          %230 = sbr.rel (%p228) target = $region20
        $region19: #{tpu_custom_call.1} parent=11 // pred_region
          %232 = vsyncadd [#allocation6], 0
          %s234 = sshll.u32 %s2, 4
          %s235 = int_to_ptr.hbm [resolvable:$true] %s234
          %s236 = sshll.u32 [#allocation7], 4
          %s237 = int_to_ptr.vmem [resolvable:$true] %s236
          %239 = dma.hbm_to_vmem [thread:$0]  %s235, 32, %s237, [#allocation6]
        $region20: #{tpu_custom_call.1} parent=11 // pred_fallthru
          _
        // Predicated region
        $region21: #{tpu_custom_call.1} parent=11 // pred_check
          %p240 = pneg %p110
        $region22: #{tpu_custom_call.1} parent=11 // pred_check_branch
          %242 = sbr.rel (%p240) target = $region24
        $region23: #{tpu_custom_call.1} parent=11 // pred_region
          %244 = vsyncadd [#allocation9], 0
          %s245 = sshll.u32 %s3, 4
          %s246 = int_to_ptr.hbm [resolvable:$true] %s245
          %s247 = sshll.u32 [#allocation8], 4
          %s248 = int_to_ptr.vmem [resolvable:$true] %s247
          %253 = dma.hbm_to_vmem [thread:$0]  %s246, 2048, %s248, [#allocation9], 64, 64, 4
        $region24: #{tpu_custom_call.1} parent=11 // pred_fallthru
          _
        // Predicated region
        $region25: #{tpu_custom_call.1} parent=11 // pred_check
          %p254 = pneg %p131
        $region26: #{tpu_custom_call.1} parent=11 // pred_check_branch
          %256 = sbr.rel (%p254) target = $region28
        $region27: #{tpu_custom_call.1} parent=11 // pred_region
          _
        $region28: #{tpu_custom_call.1} parent=11 // pred_fallthru
          _
        // Predicated region
        $region29: #{tpu_custom_call.1} parent=11 // pred_check
          %p257 = pneg %p152
        $region30: #{tpu_custom_call.1} parent=11 // pred_check_branch
          %259 = sbr.rel (%p257) target = $region32
        $region31: #{tpu_custom_call.1} parent=11 // pred_region
          %261 = vsyncadd [#allocation9], 0
          %s262 = sshll.u32 %s5, 4
          %s263 = int_to_ptr.hbm [resolvable:$true] %s262
          %s264 = sshll.u32 [#allocation10], 4
          %s265 = int_to_ptr.vmem [resolvable:$true] %s264
          %270 = dma.hbm_to_vmem [thread:$0]  %s263, 1024, %s265, [#allocation9], 64, 64, 4
        $region32: #{tpu_custom_call.1} parent=11 // pred_fallthru
          _
        // Predicated region
        $region33: #{tpu_custom_call.1} parent=11 // pred_check
          %p271 = pneg %p173
        $region34: #{tpu_custom_call.1} parent=11 // pred_check_branch
          %273 = sbr.rel (%p271) target = $region36
        $region35: #{tpu_custom_call.1} parent=11 // pred_region
          _
        $region36: #{tpu_custom_call.1} parent=11 // pred_fallthru
          _
      $region12: #{tpu_custom_call.1} parent=5 // pred_fallthru
        _
      %p274 = scmp.lt.s32.totalorder %s21, 2
      // Predicated region
      $region37: #{tpu_custom_call.1} parent=5 // pred_check
        %p275 = pneg %p274
      $region38: #{tpu_custom_call.1} parent=5 // pred_check_branch
        %277 = sbr.rel (%p275) target = $region40
      $region39: #{tpu_custom_call.1} parent=5 // pred_region
        // Predicated region
        $region41: #{tpu_custom_call.1} parent=39 // pred_check
          %p278 = pneg %p41
        $region42: #{tpu_custom_call.1} parent=39 // pred_check_branch
          %280 = sbr.rel (%p278) target = $region44
        $region43: #{tpu_custom_call.1} parent=39 // pred_region
          %s281 = sand.u32 %s31, 1
          %s282 = scalar_lea.sflag [#allocation3], %s281
          %s283 = sand.u32 %s31, 1
          %s284 = smul.addr %s283, 16
          %s285 = scalar_lea.vmem [#allocation2], %s284
          %287 = vsyncadd %s282, 0
          %s288 = smul.addr %s21, 4
          %s289 = smul.addr %s288, 4
          %s290 = scalar_lea.hbm %s0, %s289
          %s292 = sshll.u32 %s290, 4
          %s293 = int_to_ptr.hbm [resolvable:$true] %s292
          %s294 = sshll.u32 %s285, 4
          %s295 = int_to_ptr.vmem [resolvable:$true] %s294
          %297 = dma.hbm_to_vmem [thread:$0]  %s293, 256, %s295, %s282
        $region44: #{tpu_custom_call.1} parent=39 // pred_fallthru
          _
      $region40: #{tpu_custom_call.1} parent=5 // pred_fallthru
        _
      %p298 = scmp.le.s32.totalorder 1, %s21
      %p299 = scmp.lt.s32.totalorder %s21, 3
      %p300 = pnand %p298, %p299
      %p301 = pneg %p300
      // Predicated region
      $region45: #{tpu_custom_call.1} parent=5 // pred_check
        _
      $region46: #{tpu_custom_call.1} parent=5 // pred_check_branch
        %303 = sbr.rel (%p300) target = $region48
      $region47: #{tpu_custom_call.1} parent=5 // pred_region
        %s304 = ssub.s32 %s21, 1
        %s305 = sand.u32 %s34, 1
        %s306 = scalar_lea.sflag [#allocation3], %s305
        %s307 = sand.u32 %s34, 1
        %s308 = smul.addr %s307, 16
        %s309 = scalar_lea.vmem [#allocation2], %s308
        // Predicated region
        $region49: #{tpu_custom_call.1} parent=47 // pred_check
          %p310 = pneg %p47
        $region50: #{tpu_custom_call.1} parent=47 // pred_check_branch
          %312 = sbr.rel (%p310) target = $region52
        $region51: #{tpu_custom_call.1} parent=47 // pred_region
          %314 = dma.done %s306, 256
        $region52: #{tpu_custom_call.1} parent=47 // pred_fallthru
          _
        // Predicated region
        $region53: #{tpu_custom_call.1} parent=47 // pred_check
          %p315 = pneg %p68
        $region54: #{tpu_custom_call.1} parent=47 // pred_check_branch
          %317 = sbr.rel (%p315) target = $region56
        $region55: #{tpu_custom_call.1} parent=47 // pred_region
          %319 = dma.done [#allocation6], 8192
        $region56: #{tpu_custom_call.1} parent=47 // pred_fallthru
          _
        // Predicated region
        $region57: #{tpu_custom_call.1} parent=47 // pred_check
          %p320 = pneg %p89
        $region58: #{tpu_custom_call.1} parent=47 // pred_check_branch
          %322 = sbr.rel (%p320) target = $region60
        $region59: #{tpu_custom_call.1} parent=47 // pred_region
          %324 = dma.done [#allocation6], 32
        $region60: #{tpu_custom_call.1} parent=47 // pred_fallthru
          _
        // Predicated region
        $region61: #{tpu_custom_call.1} parent=47 // pred_check
          %p325 = pneg %p110
        $region62: #{tpu_custom_call.1} parent=47 // pred_check_branch
          %327 = sbr.rel (%p325) target = $region64
        $region63: #{tpu_custom_call.1} parent=47 // pred_region
          %329 = dma.done [#allocation9], 2048
        $region64: #{tpu_custom_call.1} parent=47 // pred_fallthru
          _
        // Predicated region
        $region65: #{tpu_custom_call.1} parent=47 // pred_check
          %p330 = pneg %p152
        $region66: #{tpu_custom_call.1} parent=47 // pred_check_branch
          %332 = sbr.rel (%p330) target = $region68
        $region67: #{tpu_custom_call.1} parent=47 // pred_region
          %334 = dma.done [#allocation9], 1024
        $region68: #{tpu_custom_call.1} parent=47 // pred_fallthru
          _
        %s335 = sand.u32 %s34, 1
        %s336 = scalar_lea.sflag [#allocation3], %s335
        %s337 = sand.u32 %s34, 1
        %s338 = smul.addr %s337, 16
        %s339 = scalar_lea.vmem [#allocation2], %s338
        %p340 = pneg %p47
        %p341 = pneg %p44
        %p342 = pneg %p68
        %p343 = pneg %p65
        %p344 = pneg %p89
        %p345 = pneg %p86
        %p346 = pneg %p110
        %p347 = pneg %p107
        %p348 = pneg %p131
        %p349 = pneg %p128
        %p350 = pneg %p152
        %p351 = pneg %p149
        %p352 = pneg %p173
        %p353 = pneg %p170
        %p354 = pneg %p199
        %p355 = pneg %p196
        %s356 = sand.u32 %s186, 1
        %s357 = scalar_lea.sflag [#allocation4], %s356
        %s358 = sand.u32 %s186, 1
        %s359 = smul.addr %s358, 4
        %s360 = scalar_lea.vmem [#allocation11], %s359
        %v361 = vld [vmem:[%s309] sm:$0xff]
        %v362 = vld [vmem:[%s309 + $0x8] sm:$0xff]
        %v363 = vld [vmem:[#allocation5] sm:$0xff]
        %v364 = vld [vmem:[#allocation5 + $0x8] sm:$0xff]
        %v365 = vld [vmem:[#allocation5 + $0x10] sm:$0xff]
        %v366 = vld [vmem:[#allocation5 + $0x18] sm:$0xff]
        %v367 = vld [vmem:[#allocation5 + $0x20] sm:$0xff]
        %v368 = vld [vmem:[#allocation5 + $0x28] sm:$0xff]
        %v369 = vld [vmem:[#allocation5 + $0x30] sm:$0xff]
        %v370 = vld [vmem:[#allocation5 + $0x38] sm:$0xff]
        %v371 = vld [vmem:[#allocation5 + $0x40] sm:$0xff]
        %v372 = vld [vmem:[#allocation5 + $0x48] sm:$0xff]
        %v373 = vld [vmem:[#allocation5 + $0x50] sm:$0xff]
        %v374 = vld [vmem:[#allocation5 + $0x58] sm:$0xff]
        %v375 = vld [vmem:[#allocation5 + $0x60] sm:$0xff]
        %v376 = vld [vmem:[#allocation5 + $0x68] sm:$0xff]
        %v377 = vld [vmem:[#allocation5 + $0x70] sm:$0xff]
        %v378 = vld [vmem:[#allocation5 + $0x78] sm:$0xff]
        %v379 = vld [vmem:[#allocation5 + $0x80] sm:$0xff]
        %v380 = vld [vmem:[#allocation5 + $0x88] sm:$0xff]
        %v381 = vld [vmem:[#allocation5 + $0x90] sm:$0xff]
        %v382 = vld [vmem:[#allocation5 + $0x98] sm:$0xff]
        %v383 = vld [vmem:[#allocation5 + $0xa0] sm:$0xff]
        %v384 = vld [vmem:[#allocation5 + $0xa8] sm:$0xff]
        %v385 = vld [vmem:[#allocation5 + $0xb0] sm:$0xff]
        %v386 = vld [vmem:[#allocation5 + $0xb8] sm:$0xff]
        %v387 = vld [vmem:[#allocation5 + $0xc0] sm:$0xff]
        %v388 = vld [vmem:[#allocation5 + $0xc8] sm:$0xff]
        %v389 = vld [vmem:[#allocation5 + $0xd0] sm:$0xff]
        %v390 = vld [vmem:[#allocation5 + $0xd8] sm:$0xff]
        %v391 = vld [vmem:[#allocation5 + $0xe0] sm:$0xff]
        %v392 = vld [vmem:[#allocation5 + $0xe8] sm:$0xff]
        %v393 = vld [vmem:[#allocation5 + $0xf0] sm:$0xff]
        %v394 = vld [vmem:[#allocation5 + $0xf8] sm:$0xff]
        %v395 = vld [vmem:[#allocation5 + $0x100] sm:$0xff]
        %v396 = vld [vmem:[#allocation5 + $0x108] sm:$0xff]
        %v397 = vld [vmem:[#allocation5 + $0x110] sm:$0xff]
        %v398 = vld [vmem:[#allocation5 + $0x118] sm:$0xff]
        %v399 = vld [vmem:[#allocation5 + $0x120] sm:$0xff]
        %v400 = vld [vmem:[#allocation5 + $0x128] sm:$0xff]
        %v401 = vld [vmem:[#allocation5 + $0x130] sm:$0xff]
        %v402 = vld [vmem:[#allocation5 + $0x138] sm:$0xff]
        %v403 = vld [vmem:[#allocation5 + $0x140] sm:$0xff]
        %v404 = vld [vmem:[#allocation5 + $0x148] sm:$0xff]
        %v405 = vld [vmem:[#allocation5 + $0x150] sm:$0xff]
        %v406 = vld [vmem:[#allocation5 + $0x158] sm:$0xff]
        %v407 = vld [vmem:[#allocation5 + $0x160] sm:$0xff]
        %v408 = vld [vmem:[#allocation5 + $0x168] sm:$0xff]
        %v409 = vld [vmem:[#allocation5 + $0x170] sm:$0xff]
        %v410 = vld [vmem:[#allocation5 + $0x178] sm:$0xff]
        %v411 = vld [vmem:[#allocation5 + $0x180] sm:$0xff]
        %v412 = vld [vmem:[#allocation5 + $0x188] sm:$0xff]
        %v413 = vld [vmem:[#allocation5 + $0x190] sm:$0xff]
        %v414 = vld [vmem:[#allocation5 + $0x198] sm:$0xff]
        %v415 = vld [vmem:[#allocation5 + $0x1a0] sm:$0xff]
        %v416 = vld [vmem:[#allocation5 + $0x1a8] sm:$0xff]
        %v417 = vld [vmem:[#allocation5 + $0x1b0] sm:$0xff]
        %v418 = vld [vmem:[#allocation5 + $0x1b8] sm:$0xff]
        %v419 = vld [vmem:[#allocation5 + $0x1c0] sm:$0xff]
        %v420 = vld [vmem:[#allocation5 + $0x1c8] sm:$0xff]
        %v421 = vld [vmem:[#allocation5 + $0x1d0] sm:$0xff]
        %v422 = vld [vmem:[#allocation5 + $0x1d8] sm:$0xff]
        %v423 = vld [vmem:[#allocation5 + $0x1e0] sm:$0xff]
        %v424 = vld [vmem:[#allocation5 + $0x1e8] sm:$0xff]
        %v425 = vld [vmem:[#allocation5 + $0x1f0] sm:$0xff]
        %v426 = vld [vmem:[#allocation5 + $0x1f8] sm:$0xff]
        %v427 = vld [vmem:[#allocation7] sm:$0x3]
        %v429 = vperm.slane %v427, 0
        %v430 = vperm.slane %v427, 1
        %v435 = vunpack.c.l.b16 %v361
        %v436 = vunpack.c.h.b16 %v361
        %v437 = vunpack.c.l.b16 %v362
        %v438 = vunpack.c.h.b16 %v362
        %v439 = vpack.c.b16 %v435, %v435
        %v440 = vpack.c.b16 %v436, %v436
        %v441 = vpack.c.b16 %v437, %v437
        %v442 = vpack.c.b16 %v438, %v438
        %v511 = vunpack.c.l.b16 %v363
        %v512 = vunpack.c.h.b16 %v363
        %v513 = vunpack.c.l.b16 %v364
        %v514 = vunpack.c.h.b16 %v364
        %v515 = vunpack.c.l.b16 %v365
        %v516 = vunpack.c.h.b16 %v365
        %v517 = vunpack.c.l.b16 %v366
        %v518 = vunpack.c.h.b16 %v366
        %v519 = vunpack.c.l.b16 %v367
        %v520 = vunpack.c.h.b16 %v367
        %v521 = vunpack.c.l.b16 %v368
        %v522 = vunpack.c.h.b16 %v368
        %v523 = vunpack.c.l.b16 %v369
        %v524 = vunpack.c.h.b16 %v369
        %v525 = vunpack.c.l.b16 %v370
        %v526 = vunpack.c.h.b16 %v370
        %v527 = vunpack.c.l.b16 %v371
        %v528 = vunpack.c.h.b16 %v371
        %v529 = vunpack.c.l.b16 %v372
        %v530 = vunpack.c.h.b16 %v372
        %v531 = vunpack.c.l.b16 %v373
        %v532 = vunpack.c.h.b16 %v373
        %v533 = vunpack.c.l.b16 %v374
        %v534 = vunpack.c.h.b16 %v374
        %v535 = vunpack.c.l.b16 %v375
        %v536 = vunpack.c.h.b16 %v375
        %v537 = vunpack.c.l.b16 %v376
        %v538 = vunpack.c.h.b16 %v376
        %v539 = vunpack.c.l.b16 %v377
        %v540 = vunpack.c.h.b16 %v377
        %v541 = vunpack.c.l.b16 %v378
        %v542 = vunpack.c.h.b16 %v378
        %v543 = vunpack.c.l.b16 %v379
        %v544 = vunpack.c.h.b16 %v379
        %v545 = vunpack.c.l.b16 %v380
        %v546 = vunpack.c.h.b16 %v380
        %v547 = vunpack.c.l.b16 %v381
        %v548 = vunpack.c.h.b16 %v381
        %v549 = vunpack.c.l.b16 %v382
        %v550 = vunpack.c.h.b16 %v382
        %v551 = vunpack.c.l.b16 %v383
        %v552 = vunpack.c.h.b16 %v383
        %v553 = vunpack.c.l.b16 %v384
        %v554 = vunpack.c.h.b16 %v384
        %v555 = vunpack.c.l.b16 %v385
        %v556 = vunpack.c.h.b16 %v385
        %v557 = vunpack.c.l.b16 %v386
        %v558 = vunpack.c.h.b16 %v386
        %v559 = vunpack.c.l.b16 %v387
        %v560 = vunpack.c.h.b16 %v387
        %v561 = vunpack.c.l.b16 %v388
        %v562 = vunpack.c.h.b16 %v388
        %v563 = vunpack.c.l.b16 %v389
        %v564 = vunpack.c.h.b16 %v389
        %v565 = vunpack.c.l.b16 %v390
        %v566 = vunpack.c.h.b16 %v390
        %v567 = vunpack.c.l.b16 %v391
        %v568 = vunpack.c.h.b16 %v391
        %v569 = vunpack.c.l.b16 %v392
        %v570 = vunpack.c.h.b16 %v392
        %v571 = vunpack.c.l.b16 %v393
        %v572 = vunpack.c.h.b16 %v393
        %v573 = vunpack.c.l.b16 %v394
        %v574 = vunpack.c.h.b16 %v394
        %v575 = vunpack.c.l.b16 %v395
        %v576 = vunpack.c.h.b16 %v395
        %v577 = vunpack.c.l.b16 %v396
        %v578 = vunpack.c.h.b16 %v396
        %v579 = vunpack.c.l.b16 %v397
        %v580 = vunpack.c.h.b16 %v397
        %v581 = vunpack.c.l.b16 %v398
        %v582 = vunpack.c.h.b16 %v398
        %v583 = vunpack.c.l.b16 %v399
        %v584 = vunpack.c.h.b16 %v399
        %v585 = vunpack.c.l.b16 %v400
        %v586 = vunpack.c.h.b16 %v400
        %v587 = vunpack.c.l.b16 %v401
        %v588 = vunpack.c.h.b16 %v401
        %v589 = vunpack.c.l.b16 %v402
        %v590 = vunpack.c.h.b16 %v402
        %v591 = vunpack.c.l.b16 %v403
        %v592 = vunpack.c.h.b16 %v403
        %v593 = vunpack.c.l.b16 %v404
        %v594 = vunpack.c.h.b16 %v404
        %v595 = vunpack.c.l.b16 %v405
        %v596 = vunpack.c.h.b16 %v405
        %v597 = vunpack.c.l.b16 %v406
        %v598 = vunpack.c.h.b16 %v406
        %v599 = vunpack.c.l.b16 %v407
        %v600 = vunpack.c.h.b16 %v407
        %v601 = vunpack.c.l.b16 %v408
        %v602 = vunpack.c.h.b16 %v408
        %v603 = vunpack.c.l.b16 %v409
        %v604 = vunpack.c.h.b16 %v409
        %v605 = vunpack.c.l.b16 %v410
        %v606 = vunpack.c.h.b16 %v410
        %v607 = vunpack.c.l.b16 %v411
        %v608 = vunpack.c.h.b16 %v411
        %v609 = vunpack.c.l.b16 %v412
        %v610 = vunpack.c.h.b16 %v412
        %v611 = vunpack.c.l.b16 %v413
        %v612 = vunpack.c.h.b16 %v413
        %v613 = vunpack.c.l.b16 %v414
        %v614 = vunpack.c.h.b16 %v414
        %v615 = vunpack.c.l.b16 %v415
        %v616 = vunpack.c.h.b16 %v415
        %v617 = vunpack.c.l.b16 %v416
        %v618 = vunpack.c.h.b16 %v416
        %v619 = vunpack.c.l.b16 %v417
        %v620 = vunpack.c.h.b16 %v417
        %v621 = vunpack.c.l.b16 %v418
        %v622 = vunpack.c.h.b16 %v418
        %v623 = vunpack.c.l.b16 %v419
        %v624 = vunpack.c.h.b16 %v419
        %v625 = vunpack.c.l.b16 %v420
        %v626 = vunpack.c.h.b16 %v420
        %v627 = vunpack.c.l.b16 %v421
        %v628 = vunpack.c.h.b16 %v421
        %v629 = vunpack.c.l.b16 %v422
        %v630 = vunpack.c.h.b16 %v422
        %v631 = vunpack.c.l.b16 %v423
        %v632 = vunpack.c.h.b16 %v423
        %v633 = vunpack.c.l.b16 %v424
        %v634 = vunpack.c.h.b16 %v424
        %v635 = vunpack.c.l.b16 %v425
        %v636 = vunpack.c.h.b16 %v425
        %v637 = vunpack.c.l.b16 %v426
        %v638 = vunpack.c.h.b16 %v426
        %v639 = vpack.c.b16 %v513, %v511
        %v640 = vpack.c.b16 %v514, %v512
        %v641 = vpack.c.b16 %v517, %v515
        %v642 = vpack.c.b16 %v518, %v516
        %v643 = vpack.c.b16 %v521, %v519
        %v644 = vpack.c.b16 %v522, %v520
        %v645 = vpack.c.b16 %v525, %v523
        %v646 = vpack.c.b16 %v526, %v524
        %v647 = vpack.c.b16 %v529, %v527
        %v648 = vpack.c.b16 %v530, %v528
        %v649 = vpack.c.b16 %v533, %v531
        %v650 = vpack.c.b16 %v534, %v532
        %v651 = vpack.c.b16 %v537, %v535
        %v652 = vpack.c.b16 %v538, %v536
        %v653 = vpack.c.b16 %v541, %v539
        %v654 = vpack.c.b16 %v542, %v540
        %v655 = vpack.c.b16 %v545, %v543
        %v656 = vpack.c.b16 %v546, %v544
        %v657 = vpack.c.b16 %v549, %v547
        %v658 = vpack.c.b16 %v550, %v548
        %v659 = vpack.c.b16 %v553, %v551
        %v660 = vpack.c.b16 %v554, %v552
        %v661 = vpack.c.b16 %v557, %v555
        %v662 = vpack.c.b16 %v558, %v556
        %v663 = vpack.c.b16 %v561, %v559
        %v664 = vpack.c.b16 %v562, %v560
        %v665 = vpack.c.b16 %v565, %v563
        %v666 = vpack.c.b16 %v566, %v564
        %v667 = vpack.c.b16 %v569, %v567
        %v668 = vpack.c.b16 %v570, %v568
        %v669 = vpack.c.b16 %v573, %v571
        %v670 = vpack.c.b16 %v574, %v572
        %v671 = vpack.c.b16 %v577, %v575
        %v672 = vpack.c.b16 %v578, %v576
        %v673 = vpack.c.b16 %v581, %v579
        %v674 = vpack.c.b16 %v582, %v580
        %v675 = vpack.c.b16 %v585, %v583
        %v676 = vpack.c.b16 %v586, %v584
        %v677 = vpack.c.b16 %v589, %v587
        %v678 = vpack.c.b16 %v590, %v588
        %v679 = vpack.c.b16 %v593, %v591
        %v680 = vpack.c.b16 %v594, %v592
        %v681 = vpack.c.b16 %v597, %v595
        %v682 = vpack.c.b16 %v598, %v596
        %v683 = vpack.c.b16 %v601, %v599
        %v684 = vpack.c.b16 %v602, %v600
        %v685 = vpack.c.b16 %v605, %v603
        %v686 = vpack.c.b16 %v606, %v604
        %v687 = vpack.c.b16 %v609, %v607
        %v688 = vpack.c.b16 %v610, %v608
        %v689 = vpack.c.b16 %v613, %v611
        %v690 = vpack.c.b16 %v614, %v612
        %v691 = vpack.c.b16 %v617, %v615
        %v692 = vpack.c.b16 %v618, %v616
        %v693 = vpack.c.b16 %v621, %v619
        %v694 = vpack.c.b16 %v622, %v620
        %v695 = vpack.c.b16 %v625, %v623
        %v696 = vpack.c.b16 %v626, %v624
        %v697 = vpack.c.b16 %v629, %v627
        %v698 = vpack.c.b16 %v630, %v628
        %v699 = vpack.c.b16 %v633, %v631
        %v700 = vpack.c.b16 %v634, %v632
        %v701 = vpack.c.b16 %v637, %v635
        %v702 = vpack.c.b16 %v638, %v636
        %767 = vmatpush.bf16.msra.mxu0 %v653
        %768 = vmatpush.bf16.msra.mxu0 %v651
        %769 = vmatpush.bf16.msra.mxu0 %v649
        %770 = vmatpush.bf16.msra.mxu0 %v647
        %771 = vmatpush.bf16.msra.mxu0 %v645
        %772 = vmatpush.bf16.msra.mxu0 %v643
        %773 = vmatpush.bf16.msra.mxu0 %v641
        %774 = vmatpush.bf16.msra.mxu0 %v639
        %775 = vmatmul.bf16.gmra.mxu0 %v439
        %v776 = vpop.f32.mrf.mxu0
        %v777 = vadd.f32 %v429, %v776
        %v778 = vpop.f32.mrf.mxu0
        %779 = vdwg.mxu0
        %780 = vmatpush.bf16.msra.mxu0 %v669
        %781 = vmatpush.bf16.msra.mxu0 %v667
        %782 = vmatpush.bf16.msra.mxu0 %v665
        %783 = vmatpush.bf16.msra.mxu0 %v663
        %784 = vmatpush.bf16.msra.mxu0 %v661
        %785 = vmatpush.bf16.msra.mxu0 %v659
        %786 = vmatpush.bf16.msra.mxu0 %v657
        %787 = vmatpush.bf16.msra.mxu0 %v655
        %788 = vmatmul.bf16.gmra.mxu0 %v440
        %v789 = vpop.f32.mrf.mxu0
        %v790 = vadd.f32 %v777, %v789
        %v791 = vpop.f32.mrf.mxu0
        %792 = vdwg.mxu0
        %793 = vmatpush.bf16.msra.mxu0 %v685
        %794 = vmatpush.bf16.msra.mxu0 %v683
        %795 = vmatpush.bf16.msra.mxu0 %v681
        %796 = vmatpush.bf16.msra.mxu0 %v679
        %797 = vmatpush.bf16.msra.mxu0 %v677
        %798 = vmatpush.bf16.msra.mxu0 %v675
        %799 = vmatpush.bf16.msra.mxu0 %v673
        %800 = vmatpush.bf16.msra.mxu0 %v671
        %801 = vmatmul.bf16.gmra.mxu0 %v441
        %v802 = vpop.f32.mrf.mxu0
        %v803 = vadd.f32 %v790, %v802
        %v804 = vpop.f32.mrf.mxu0
        %805 = vdwg.mxu0
        %806 = vmatpush.bf16.msra.mxu0 %v701
        %807 = vmatpush.bf16.msra.mxu0 %v699
        %808 = vmatpush.bf16.msra.mxu0 %v697
        %809 = vmatpush.bf16.msra.mxu0 %v695
        %810 = vmatpush.bf16.msra.mxu0 %v693
        %811 = vmatpush.bf16.msra.mxu0 %v691
        %812 = vmatpush.bf16.msra.mxu0 %v689
        %813 = vmatpush.bf16.msra.mxu0 %v687
        %814 = vmatmul.bf16.gmra.mxu0 %v442
        %v815 = vpop.f32.mrf.mxu0
        %v816 = vadd.f32 %v803, %v815
        %v817 = vpop.f32.mrf.mxu0
        %818 = vdwg.mxu0
        %819 = vmatpush.bf16.msra.mxu0 %v654
        %820 = vmatpush.bf16.msra.mxu0 %v652
        %821 = vmatpush.bf16.msra.mxu0 %v650
        %822 = vmatpush.bf16.msra.mxu0 %v648
        %823 = vmatpush.bf16.msra.mxu0 %v646
        %824 = vmatpush.bf16.msra.mxu0 %v644
        %825 = vmatpush.bf16.msra.mxu0 %v642
        %826 = vmatpush.bf16.msra.mxu0 %v640
        %827 = vmatmul.bf16.gmra.mxu0 %v439
        %v828 = vpop.f32.mrf.mxu0
        %v829 = vadd.f32 %v430, %v828
        %v830 = vpop.f32.mrf.mxu0
        %831 = vdwg.mxu0
        %832 = vmatpush.bf16.msra.mxu0 %v670
        %833 = vmatpush.bf16.msra.mxu0 %v668
        %834 = vmatpush.bf16.msra.mxu0 %v666
        %835 = vmatpush.bf16.msra.mxu0 %v664
        %836 = vmatpush.bf16.msra.mxu0 %v662
        %837 = vmatpush.bf16.msra.mxu0 %v660
        %838 = vmatpush.bf16.msra.mxu0 %v658
        %839 = vmatpush.bf16.msra.mxu0 %v656
        %840 = vmatmul.bf16.gmra.mxu0 %v440
        %v841 = vpop.f32.mrf.mxu0
        %v842 = vadd.f32 %v829, %v841
        %v843 = vpop.f32.mrf.mxu0
        %844 = vdwg.mxu0
        %845 = vmatpush.bf16.msra.mxu0 %v686
        %846 = vmatpush.bf16.msra.mxu0 %v684
        %847 = vmatpush.bf16.msra.mxu0 %v682
        %848 = vmatpush.bf16.msra.mxu0 %v680
        %849 = vmatpush.bf16.msra.mxu0 %v678
        %850 = vmatpush.bf16.msra.mxu0 %v676
        %851 = vmatpush.bf16.msra.mxu0 %v674
        %852 = vmatpush.bf16.msra.mxu0 %v672
        %853 = vmatmul.bf16.gmra.mxu0 %v441
        %v854 = vpop.f32.mrf.mxu0
        %v855 = vadd.f32 %v842, %v854
        %v856 = vpop.f32.mrf.mxu0
        %857 = vdwg.mxu0
        %858 = vmatpush.bf16.msra.mxu0 %v702
        %859 = vmatpush.bf16.msra.mxu0 %v700
        %860 = vmatpush.bf16.msra.mxu0 %v698
        %861 = vmatpush.bf16.msra.mxu0 %v696
        %862 = vmatpush.bf16.msra.mxu0 %v694
        %863 = vmatpush.bf16.msra.mxu0 %v692
        %864 = vmatpush.bf16.msra.mxu0 %v690
        %865 = vmatpush.bf16.msra.mxu0 %v688
        %866 = vmatmul.bf16.gmra.mxu0 %v442
        %v867 = vpop.f32.mrf.mxu0
        %v868 = vadd.f32 %v855, %v867
        %v869 = vpop.f32.mrf.mxu0
        %870 = vdwg.mxu0
        %v871 = vmax.f32 %v816, 0.0
        %v872 = vmax.f32 %v868, 0.0
        %v873 = vpack.c.bf16 %v871, %v871
        %v874 = vpack.c.bf16 %v872, %v872
        %v875 = vld [vmem:[#allocation8] sm:$0xf]
        %v876 = vld [vmem:[#allocation8 + $0x4] sm:$0xf]
        %v877 = vld [vmem:[#allocation8 + $0x8] sm:$0xf]
        %v878 = vld [vmem:[#allocation8 + $0xc] sm:$0xf]
        %v879 = vld [vmem:[#allocation8 + $0x10] sm:$0xf]
        %v880 = vld [vmem:[#allocation8 + $0x14] sm:$0xf]
        %v881 = vld [vmem:[#allocation8 + $0x18] sm:$0xf]
        %v882 = vld [vmem:[#allocation8 + $0x1c] sm:$0xf]
        %v883 = vld [vmem:[#allocation8 + $0x20] sm:$0xf]
        %v884 = vld [vmem:[#allocation8 + $0x24] sm:$0xf]
        %v885 = vld [vmem:[#allocation8 + $0x28] sm:$0xf]
        %v886 = vld [vmem:[#allocation8 + $0x2c] sm:$0xf]
        %v887 = vld [vmem:[#allocation8 + $0x30] sm:$0xf]
        %v888 = vld [vmem:[#allocation8 + $0x34] sm:$0xf]
        %v889 = vld [vmem:[#allocation8 + $0x38] sm:$0xf]
        %v890 = vld [vmem:[#allocation8 + $0x3c] sm:$0xf]
        %v891 = vld [vmem:[#allocation8 + $0x40] sm:$0xf]
        %v892 = vld [vmem:[#allocation8 + $0x44] sm:$0xf]
        %v893 = vld [vmem:[#allocation8 + $0x48] sm:$0xf]
        %v894 = vld [vmem:[#allocation8 + $0x4c] sm:$0xf]
        %v895 = vld [vmem:[#allocation8 + $0x50] sm:$0xf]
        %v896 = vld [vmem:[#allocation8 + $0x54] sm:$0xf]
        %v897 = vld [vmem:[#allocation8 + $0x58] sm:$0xf]
        %v898 = vld [vmem:[#allocation8 + $0x5c] sm:$0xf]
        %v899 = vld [vmem:[#allocation8 + $0x60] sm:$0xf]
        %v900 = vld [vmem:[#allocation8 + $0x64] sm:$0xf]
        %v901 = vld [vmem:[#allocation8 + $0x68] sm:$0xf]
        %v902 = vld [vmem:[#allocation8 + $0x6c] sm:$0xf]
        %v903 = vld [vmem:[#allocation8 + $0x70] sm:$0xf]
        %v904 = vld [vmem:[#allocation8 + $0x74] sm:$0xf]
        %v905 = vld [vmem:[#allocation8 + $0x78] sm:$0xf]
        %v906 = vld [vmem:[#allocation8 + $0x7c] sm:$0xf]
        %v907 = vld [vmem:[%s4] sm:$0x1]
        %v909 = vperm.slane %v907, 0
        %v943 = vunpack.c.l.b16 %v875
        %v944 = vunpack.c.l.b16 %v876
        %v945 = vunpack.c.l.b16 %v877
        %v946 = vunpack.c.l.b16 %v878
        %v947 = vunpack.c.l.b16 %v879
        %v948 = vunpack.c.l.b16 %v880
        %v949 = vunpack.c.l.b16 %v881
        %v950 = vunpack.c.l.b16 %v882
        %v951 = vunpack.c.l.b16 %v883
        %v952 = vunpack.c.l.b16 %v884
        %v953 = vunpack.c.l.b16 %v885
        %v954 = vunpack.c.l.b16 %v886
        %v955 = vunpack.c.l.b16 %v887
        %v956 = vunpack.c.l.b16 %v888
        %v957 = vunpack.c.l.b16 %v889
        %v958 = vunpack.c.l.b16 %v890
        %v959 = vunpack.c.l.b16 %v891
        %v960 = vunpack.c.l.b16 %v892
        %v961 = vunpack.c.l.b16 %v893
        %v962 = vunpack.c.l.b16 %v894
        %v963 = vunpack.c.l.b16 %v895
        %v964 = vunpack.c.l.b16 %v896
        %v965 = vunpack.c.l.b16 %v897
        %v966 = vunpack.c.l.b16 %v898
        %v967 = vunpack.c.l.b16 %v899
        %v968 = vunpack.c.l.b16 %v900
        %v969 = vunpack.c.l.b16 %v901
        %v970 = vunpack.c.l.b16 %v902
        %v971 = vunpack.c.l.b16 %v903
        %v972 = vunpack.c.l.b16 %v904
        %v973 = vunpack.c.l.b16 %v905
        %v974 = vunpack.c.l.b16 %v906
        %v975 = vpack.c.b16 %v944, %v943
        %v976 = vpack.c.b16 %v946, %v945
        %v977 = vpack.c.b16 %v948, %v947
        %v978 = vpack.c.b16 %v950, %v949
        %v979 = vpack.c.b16 %v952, %v951
        %v980 = vpack.c.b16 %v954, %v953
        %v981 = vpack.c.b16 %v956, %v955
        %v982 = vpack.c.b16 %v958, %v957
        %v983 = vpack.c.b16 %v960, %v959
        %v984 = vpack.c.b16 %v962, %v961
        %v985 = vpack.c.b16 %v964, %v963
        %v986 = vpack.c.b16 %v966, %v965
        %v987 = vpack.c.b16 %v968, %v967
        %v988 = vpack.c.b16 %v970, %v969
        %v989 = vpack.c.b16 %v972, %v971
        %v990 = vpack.c.b16 %v974, %v973
        %1007 = vmatpush.bf16.msra.mxu0 %v982
        %1008 = vmatpush.bf16.msra.mxu0 %v981
        %1009 = vmatpush.bf16.msra.mxu0 %v980
        %1010 = vmatpush.bf16.msra.mxu0 %v979
        %1011 = vmatpush.bf16.msra.mxu0 %v978
        %1012 = vmatpush.bf16.msra.mxu0 %v977
        %1013 = vmatpush.bf16.msra.mxu0 %v976
        %1014 = vmatpush.bf16.msra.mxu0 %v975
        %1015 = vmatmul.bf16.gmra.mxu0 %v873
        %v1016 = vpop.f32.mrf.mxu0
        %v1017 = vadd.f32 %v909, %v1016
        %v1018 = vpop.f32.mrf.mxu0
        %1019 = vdwg.mxu0
        %1020 = vmatpush.bf16.msra.mxu0 %v990
        %1021 = vmatpush.bf16.msra.mxu0 %v989
        %1022 = vmatpush.bf16.msra.mxu0 %v988
        %1023 = vmatpush.bf16.msra.mxu0 %v987
        %1024 = vmatpush.bf16.msra.mxu0 %v986
        %1025 = vmatpush.bf16.msra.mxu0 %v985
        %1026 = vmatpush.bf16.msra.mxu0 %v984
        %1027 = vmatpush.bf16.msra.mxu0 %v983
        %1028 = vmatmul.bf16.gmra.mxu0 %v874
        %v1029 = vpop.f32.mrf.mxu0
        %v1030 = vadd.f32 %v1017, %v1029
        %v1031 = vpop.f32.mrf.mxu0
        %1032 = vdwg.mxu0
        %v1033 = vmax.f32 %v1030, 0.0
        %v1034 = vpack.c.bf16 %v1033, %v1033
        %v1035 = vld [vmem:[#allocation10] sm:$0xf]
        %v1036 = vld [vmem:[#allocation10 + $0x4] sm:$0xf]
        %v1037 = vld [vmem:[#allocation10 + $0x8] sm:$0xf]
        %v1038 = vld [vmem:[#allocation10 + $0xc] sm:$0xf]
        %v1039 = vld [vmem:[#allocation10 + $0x10] sm:$0xf]
        %v1040 = vld [vmem:[#allocation10 + $0x14] sm:$0xf]
        %v1041 = vld [vmem:[#allocation10 + $0x18] sm:$0xf]
        %v1042 = vld [vmem:[#allocation10 + $0x1c] sm:$0xf]
        %v1043 = vld [vmem:[#allocation10 + $0x20] sm:$0xf]
        %v1044 = vld [vmem:[#allocation10 + $0x24] sm:$0xf]
        %v1045 = vld [vmem:[#allocation10 + $0x28] sm:$0xf]
        %v1046 = vld [vmem:[#allocation10 + $0x2c] sm:$0xf]
        %v1047 = vld [vmem:[#allocation10 + $0x30] sm:$0xf]
        %v1048 = vld [vmem:[#allocation10 + $0x34] sm:$0xf]
        %v1049 = vld [vmem:[#allocation10 + $0x38] sm:$0xf]
        %v1050 = vld [vmem:[#allocation10 + $0x3c] sm:$0xf]
        %v1051 = vld [vmem:[%s6] sm:$0x1]
        %v1053 = vperm.slane %v1051, 0
        %v1071 = vunpack.c.l.b16 %v1035
        %v1072 = vunpack.c.l.b16 %v1036
        %v1073 = vunpack.c.l.b16 %v1037
        %v1074 = vunpack.c.l.b16 %v1038
        %v1075 = vunpack.c.l.b16 %v1039
        %v1076 = vunpack.c.l.b16 %v1040
        %v1077 = vunpack.c.l.b16 %v1041
        %v1078 = vunpack.c.l.b16 %v1042
        %v1079 = vunpack.c.l.b16 %v1043
        %v1080 = vunpack.c.l.b16 %v1044
        %v1081 = vunpack.c.l.b16 %v1045
        %v1082 = vunpack.c.l.b16 %v1046
        %v1083 = vunpack.c.l.b16 %v1047
        %v1084 = vunpack.c.l.b16 %v1048
        %v1085 = vunpack.c.l.b16 %v1049
        %v1086 = vunpack.c.l.b16 %v1050
        %v1087 = vpack.c.b16 %v1072, %v1071
        %v1088 = vpack.c.b16 %v1074, %v1073
        %v1089 = vpack.c.b16 %v1076, %v1075
        %v1090 = vpack.c.b16 %v1078, %v1077
        %v1091 = vpack.c.b16 %v1080, %v1079
        %v1092 = vpack.c.b16 %v1082, %v1081
        %v1093 = vpack.c.b16 %v1084, %v1083
        %v1094 = vpack.c.b16 %v1086, %v1085
        %1103 = vmatpush.bf16.msra.mxu0 %v1094
        %1104 = vmatpush.bf16.msra.mxu0 %v1093
        %1105 = vmatpush.bf16.msra.mxu0 %v1092
        %1106 = vmatpush.bf16.msra.mxu0 %v1091
        %1107 = vmatpush.bf16.msra.mxu0 %v1090
        %1108 = vmatpush.bf16.msra.mxu0 %v1089
        %1109 = vmatpush.bf16.msra.mxu0 %v1088
        %1110 = vmatpush.bf16.msra.mxu0 %v1087
        %1111 = vmatmul.bf16.gmra.mxu0 %v1034
        %v1112 = vpop.f32.mrf.mxu0
        %v1113 = vadd.f32 %v1053, %v1112
        %v1114 = vpop.f32.mrf.mxu0
        %1115 = vdwg.mxu0
        %v1116 = vpack.c.bf16 %v1113, %v1113
        %1117 = vst [vmem:[%s360] sm:$0xf] %v1116
        %s1118 = sand.u32 %s186, 1
        %s1119 = scalar_lea.sflag [#allocation4], %s1118
        %s1120 = sand.u32 %s186, 1
        %s1121 = smul.addr %s1120, 4
        %s1122 = scalar_lea.vmem [#allocation11], %s1121
        // Predicated region
        $region69: #{tpu_custom_call.1} parent=47 // pred_check
          %p1123 = pneg %p196
        $region70: #{tpu_custom_call.1} parent=47 // pred_check_branch
          %1125 = sbr.rel (%p1123) target = $region72
        $region71: #{tpu_custom_call.1} parent=47 // pred_region
          %1127 = vsyncadd %s1119, 0
          %s1128 = smul.addr %s26, 4
          %s1129 = scalar_lea.hbm %s7, %s1128
          %s1131 = sshll.u32 %s1122, 4
          %s1132 = int_to_ptr.vmem [resolvable:$true] %s1131
          %s1133 = sshll.u32 %s1129, 4
          %s1134 = int_to_ptr.hbm [resolvable:$true] %s1133
          %1136 = dma.vmem_to_hbm [thread:$0]  %s1132, 64, %s1134, %s1119
        $region72: #{tpu_custom_call.1} parent=47 // pred_fallthru
          _
      $region48: #{tpu_custom_call.1} parent=5 // pred_fallthru
        _
      %p1137 = scmp.le.s32.totalorder 2, %s21
      // Predicated region
      $region73: #{tpu_custom_call.1} parent=5 // pred_check
        %p1138 = pneg %p1137
      $region74: #{tpu_custom_call.1} parent=5 // pred_check_branch
        %1140 = sbr.rel (%p1138) target = $region76
      $region75: #{tpu_custom_call.1} parent=5 // pred_region
        %s1141 = ssub.s32 %s21, 2
        // Predicated region
        $region77: #{tpu_custom_call.1} parent=75 // pred_check
          %p1142 = pneg %p202
        $region78: #{tpu_custom_call.1} parent=75 // pred_check_branch
          %1144 = sbr.rel (%p1142) target = $region80
        $region79: #{tpu_custom_call.1} parent=75 // pred_region
          %s1145 = sand.u32 %s187, 1
          %s1146 = scalar_lea.sflag [#allocation4], %s1145
          %s1147 = sand.u32 %s187, 1
          %s1148 = smul.addr %s1147, 4
          %s1149 = scalar_lea.vmem [#allocation11], %s1148
          %1151 = dma.done %s1146, 64
        $region80: #{tpu_custom_call.1} parent=75 // pred_fallthru
          _
      $region76: #{tpu_custom_call.1} parent=5 // pred_fallthru
        _
    $region6: #{tpu_custom_call.1} parent=1 // loop_footer
      %s25 = sadd.s32 1, %s21
    $region7: #{tpu_custom_call.1} parent=1 // loop_footer_branch
      %20 = sbr.rel target = $region3
    $region8: #{tpu_custom_call.1} parent=1 // loop_exit
      _
    %1152 = vsyncpa [#allocation3], 1
    %s1153 = scalar_lea.sflag [#allocation3], 1
    %1154 = vsyncpa %s1153, 1
    %1155 = vsyncpa [#allocation6], 1
    %1156 = vsyncpa [#allocation9], 1
    %1157 = vsyncpa [#allocation4], 1
    %s1158 = scalar_lea.sflag [#allocation4], 1
    %1159 = vsyncpa %s1158, 1

</llo_original>
